<compile_context>
chip_gen: v5e
topology: v5e:2x2
jax: 0.10.0
libtpu: 0.0.40
codegen_flags: <defaults>
</compile_context>

<pallas_src>
import functools

import jax
import jax.numpy as jnp
from jax.experimental import pallas as pl
from jax.experimental.pallas import tpu as pltpu

_LANE = 128


def _round_up(n, m):
    return ((n + m - 1) // m) * m


def _mlp_kernel(n_layers, *refs):
    """refs = (x_ref, w1_ref, b1_ref, ..., wN_ref, bN_ref, out_ref).

    x/W are bf16; matmuls accumulate in f32 on the MXU; bias add and ReLU run
    in f32 on the VPU; only the input to the next matmul is cast back to bf16.
    """
    x_ref = refs[0]
    out_ref = refs[-1]
    h = x_ref[...]  # bf16 activations
    for i in range(n_layers):
        w_ref = refs[1 + 2 * i]
        b_ref = refs[2 + 2 * i]
        acc = jnp.dot(h, w_ref[...], preferred_element_type=jnp.float32) + b_ref[...]
        if i != n_layers - 1:
            acc = jnp.maximum(acc, 0.0)          # ReLU between hidden layers only
            h = acc.astype(jnp.bfloat16)          # bf16 feed for the next MXU pass
        else:
            h = acc                               # final layer: keep f32
    out_ref[...] = h


def _pad_params(params):
    """Zero-pad every layer's output width (and the next layer's input width)
    up to a multiple of 128 lanes. Weights -> bf16, biases -> f32."""
    padded = []
    prev_out_pad = params[0][0].shape[0]  # input feature dim stays unpadded
    for (w, b) in params:
        in_dim, out_dim = w.shape
        in_pad = prev_out_pad
        out_pad = _round_up(out_dim, _LANE)
        w_p = jnp.zeros((in_pad, out_pad), jnp.bfloat16)
        w_p = w_p.at[:in_dim, :out_dim].set(w.astype(jnp.bfloat16))
        b_p = jnp.zeros((1, out_pad), jnp.float32)
        b_p = b_p.at[:, :out_dim].set(b.astype(jnp.float32))
        padded.append((w_p, b_p))
        prev_out_pad = out_pad
    return padded


def torch_model_forward(x, params, *, block_batch=512):
    """params: list of (W, b) with W shape (in, out) [PyTorch weight transposed],
    b shape (1, out). Returns f32 (batch, out_dim)."""
    assert block_batch % 8 == 0, "batch tile must be a multiple of 8 sublanes"
    n_layers = len(params)
    batch, in_dim = x.shape
    out_dim = params[-1][0].shape[1]

    padded_params = _pad_params(params)
    out_pad = padded_params[-1][0].shape[1]

    # Batch tiling: pick a tile no larger than needed, pad batch to a multiple.
    tb = min(block_batch, _round_up(batch, 8))
    padded_batch = _round_up(batch, tb)

    # feature_mat.float() then bf16 for the MXU (halves the streamed HBM bytes).
    x_bf16 = x.astype(jnp.float32).astype(jnp.bfloat16)
    if padded_batch != batch:
        x_bf16 = jnp.pad(x_bf16, ((0, padded_batch - batch), (0, 0)))

    flat_inputs = [x_bf16]
    in_specs = [pl.BlockSpec((tb, in_dim), lambda i: (i, 0))]
    for (w_p, b_p) in padded_params:
        flat_inputs.append(w_p)
        in_specs.append(pl.BlockSpec(w_p.shape, lambda i: (0, 0)))  # VMEM-resident
        flat_inputs.append(b_p)
        in_specs.append(pl.BlockSpec(b_p.shape, lambda i: (0, 0)))  # VMEM-resident

    kernel = functools.partial(_mlp_kernel, n_layers)

    out_padded = pl.pallas_call(
        kernel,
        out_shape=jax.ShapeDtypeStruct((padded_batch, out_pad), jnp.float32),
        grid=(padded_batch // tb,),
        in_specs=in_specs,
        out_specs=pl.BlockSpec((tb, out_pad), lambda i: (i, 0)),
        compiler_params=pltpu.CompilerParams(
            dimension_semantics=("parallel",),  # shard batch tiles across v7x's 2 TCs
        ),
    )(*flat_inputs)

    return out_padded[:batch, :out_dim]


def init_params(key, units_per_layer):
    """Deterministic init mimicking torch.nn.Linear defaults:
    U(-1/sqrt(fan_in), 1/sqrt(fan_in)) for both weight and bias."""
    params = []
    for layer_i in range(len(units_per_layer) - 1):
        fan_in = units_per_layer[layer_i]
        fan_out = units_per_layer[layer_i + 1]
        key, kw, kb = jax.random.split(key, 3)
        bound = 1.0 / jnp.sqrt(jnp.float32(fan_in))
        w = jax.random.uniform(kw, (fan_in, fan_out), jnp.float32, -bound, bound)
        b = jax.random.uniform(kb, (1, fan_out), jnp.float32, -bound, bound)
        params.append((w, b))
    return params


def reference_forward_f32(x, params):
    """Pure f32 reference (the original module's math)."""
    h = x.astype(jnp.float32)
    for i, (w, b) in enumerate(params):
        h = h @ w + b
        if i != len(params) - 1:
            h = jnp.maximum(h, 0.0)
    return h


def reference_forward_bf16(x, params):
    """Reference emulating the kernel's bf16-input / f32-accumulate matmuls."""
    h = x.astype(jnp.float32).astype(jnp.bfloat16)
    for i, (w, b) in enumerate(params):
        acc = jnp.dot(h.astype(jnp.float32),
                      w.astype(jnp.bfloat16).astype(jnp.float32)) + b
        if i != len(params) - 1:
            acc = jnp.maximum(acc, 0.0)
            h = acc.astype(jnp.bfloat16)
        else:
            h = acc
    return h


if __name__ == "__main__":
    # TorchModel(32, 64, 48, 16): 3 Linear layers, ReLU after the first two.
    units_per_layer = (32, 64, 48, 16)
    batch = 256  # streamed through the grid in 128-row tiles -> grid=(2,)

    key = jax.random.PRNGKey(0)
    key, kx = jax.random.split(key)
    x = jax.random.normal(kx, (batch, units_per_layer[0]), jnp.float32)

    params = init_params(key, units_per_layer)

    out = torch_model_forward(x, params, block_batch=128)
    out = jax.block_until_ready(out)

    assert out.shape == (batch, units_per_layer[-1])

    # Tight check against a reference that emulates bf16 MXU inputs.
    ref_bf16 = reference_forward_bf16(x, params)
    assert jnp.allclose(out, ref_bf16, atol=1e-3, rtol=1e-3), "mismatch vs bf16-emulating reference"

    # Loose check against the pure-f32 module math (bf16 rounding is the only difference).
    ref_f32 = reference_forward_f32(x, params)
    assert jnp.allclose(out, ref_f32, atol=3e-2, rtol=3e-2), "mismatch vs f32 reference"

    print("KERNEL_OK")
</pallas_src>

<mosaic_0001>
module attributes {stable_mosaic.version = 11 : i64} {
  func.func @_mlp_kernel(%arg0: i32, %arg1: memref<128x32xbf16, #tpu.memory_space<vmem>>, %arg2: memref<32x128xbf16, #tpu.memory_space<vmem>>, %arg3: memref<1x128xf32, #tpu.memory_space<vmem>>, %arg4: memref<128x128xbf16, #tpu.memory_space<vmem>>, %arg5: memref<1x128xf32, #tpu.memory_space<vmem>>, %arg6: memref<128x128xbf16, #tpu.memory_space<vmem>>, %arg7: memref<1x128xf32, #tpu.memory_space<vmem>>, %arg8: memref<128x128xf32, #tpu.memory_space<vmem>>) attributes {dimension_semantics = [#tpu.dimension_semantics<parallel>], iteration_bounds = array<i64: 2>, scalar_prefetch = 0 : i64, scratch_operands = 0 : i64, tpu.core_type = #tpu.core_type<tc>, window_params = [{transform_indices = @transform_0, window_bounds = array<i64: 128, 32>}, {pipeline_mode = #tpu.pipeline_mode<synchronous>, transform_indices = @transform_1, window_bounds = array<i64: 32, 128>}, {pipeline_mode = #tpu.pipeline_mode<synchronous>, transform_indices = @transform_2, window_bounds = array<i64: 1, 128>}, {pipeline_mode = #tpu.pipeline_mode<synchronous>, transform_indices = @transform_3, window_bounds = array<i64: 128, 128>}, {pipeline_mode = #tpu.pipeline_mode<synchronous>, transform_indices = @transform_4, window_bounds = array<i64: 1, 128>}, {pipeline_mode = #tpu.pipeline_mode<synchronous>, transform_indices = @transform_5, window_bounds = array<i64: 128, 128>}, {pipeline_mode = #tpu.pipeline_mode<synchronous>, transform_indices = @transform_6, window_bounds = array<i64: 1, 128>}, {transform_indices = @transform_7, window_bounds = array<i64: 128, 128>}]} {
    %c0 = arith.constant 0 : index
    %c0_0 = arith.constant 0 : index
    %0 = vector.load %arg1[%c0, %c0_0] : memref<128x32xbf16, #tpu.memory_space<vmem>>, vector<128x32xbf16>
    %c0_1 = arith.constant 0 : index
    %c0_2 = arith.constant 0 : index
    %1 = vector.load %arg2[%c0_1, %c0_2] : memref<32x128xbf16, #tpu.memory_space<vmem>>, vector<32x128xbf16>
    %cst = arith.constant dense<0.000000e+00> : vector<128x128xf32>
    %2 = tpu.matmul %0, %1, %cst {dimension_numbers = #tpu.dot_dimension_numbers<[1], [0], [0], [1], [0, 0, 1, 1], [], []>} : vector<128x32xbf16>, vector<32x128xbf16>, vector<128x128xf32> -> vector<128x128xf32>
    %c0_3 = arith.constant 0 : index
    %c0_4 = arith.constant 0 : index
    %3 = vector.load %arg3[%c0_3, %c0_4] : memref<1x128xf32, #tpu.memory_space<vmem>>, vector<1x128xf32>
    %4 = vector.broadcast %3 : vector<1x128xf32> to vector<128x128xf32>
    %5 = arith.addf %2, %4 : vector<128x128xf32>
    %cst_5 = arith.constant 0.000000e+00 : f32
    %6 = vector.broadcast %cst_5 : f32 to vector<128x128xf32>
    %7 = arith.maximumf %5, %6 : vector<128x128xf32>
    %8 = arith.truncf %7 : vector<128x128xf32> to vector<128x128xbf16>
    %c0_6 = arith.constant 0 : index
    %c0_7 = arith.constant 0 : index
    %9 = vector.load %arg4[%c0_6, %c0_7] : memref<128x128xbf16, #tpu.memory_space<vmem>>, vector<128x128xbf16>
    %cst_8 = arith.constant dense<0.000000e+00> : vector<128x128xf32>
    %10 = tpu.matmul %8, %9, %cst_8 {dimension_numbers = #tpu.dot_dimension_numbers<[1], [0], [0], [1], [0, 0, 1, 1], [], []>} : vector<128x128xbf16>, vector<128x128xbf16>, vector<128x128xf32> -> vector<128x128xf32>
    %c0_9 = arith.constant 0 : index
    %c0_10 = arith.constant 0 : index
    %11 = vector.load %arg5[%c0_9, %c0_10] : memref<1x128xf32, #tpu.memory_space<vmem>>, vector<1x128xf32>
    %12 = vector.broadcast %11 : vector<1x128xf32> to vector<128x128xf32>
    %13 = arith.addf %10, %12 : vector<128x128xf32>
    %cst_11 = arith.constant 0.000000e+00 : f32
    %14 = vector.broadcast %cst_11 : f32 to vector<128x128xf32>
    %15 = arith.maximumf %13, %14 : vector<128x128xf32>
    %16 = arith.truncf %15 : vector<128x128xf32> to vector<128x128xbf16>
    %c0_12 = arith.constant 0 : index
    %c0_13 = arith.constant 0 : index
    %17 = vector.load %arg6[%c0_12, %c0_13] : memref<128x128xbf16, #tpu.memory_space<vmem>>, vector<128x128xbf16>
    %cst_14 = arith.constant dense<0.000000e+00> : vector<128x128xf32>
    %18 = tpu.matmul %16, %17, %cst_14 {dimension_numbers = #tpu.dot_dimension_numbers<[1], [0], [0], [1], [0, 0, 1, 1], [], []>} : vector<128x128xbf16>, vector<128x128xbf16>, vector<128x128xf32> -> vector<128x128xf32>
    %c0_15 = arith.constant 0 : index
    %c0_16 = arith.constant 0 : index
    %19 = vector.load %arg7[%c0_15, %c0_16] : memref<1x128xf32, #tpu.memory_space<vmem>>, vector<1x128xf32>
    %20 = vector.broadcast %19 : vector<1x128xf32> to vector<128x128xf32>
    %21 = arith.addf %18, %20 : vector<128x128xf32>
    %c0_17 = arith.constant 0 : index
    %c0_18 = arith.constant 0 : index
    %22 = vector.load %arg8[%c0_17, %c0_18] : memref<128x128xf32, #tpu.memory_space<vmem>>, vector<128x128xf32>
    tpu.vector_store %arg8[%c0_17, %c0_18], %21 {strides = array<i32>} : memref<128x128xf32, #tpu.memory_space<vmem>>, vector<128x128xf32>,
    return
  }
  func.func @transform_0(%arg0: i32) -> (i32, i32) {
    %c0_i32 = arith.constant 0 : i32
    %c0_i32_0 = arith.constant 0 : i32
    return %arg0, %c0_i32 : i32, i32
  }
  func.func @transform_1(%arg0: i32) -> (i32, i32) {
    %c0_i32 = arith.constant 0 : i32
    %c0_i32_0 = arith.constant 0 : i32
    %c0_i32_1 = arith.constant 0 : i32
    return %c0_i32, %c0_i32_0 : i32, i32
  }
  func.func @transform_2(%arg0: i32) -> (i32, i32) {
    %c0_i32 = arith.constant 0 : i32
    %c0_i32_0 = arith.constant 0 : i32
    %c0_i32_1 = arith.constant 0 : i32
    return %c0_i32, %c0_i32_0 : i32, i32
  }
  func.func @transform_3(%arg0: i32) -> (i32, i32) {
    %c0_i32 = arith.constant 0 : i32
    %c0_i32_0 = arith.constant 0 : i32
    %c0_i32_1 = arith.constant 0 : i32
    return %c0_i32, %c0_i32_0 : i32, i32
  }
  func.func @transform_4(%arg0: i32) -> (i32, i32) {
    %c0_i32 = arith.constant 0 : i32
    %c0_i32_0 = arith.constant 0 : i32
    %c0_i32_1 = arith.constant 0 : i32
    return %c0_i32, %c0_i32_0 : i32, i32
  }
  func.func @transform_5(%arg0: i32) -> (i32, i32) {
    %c0_i32 = arith.constant 0 : i32
    %c0_i32_0 = arith.constant 0 : i32
    %c0_i32_1 = arith.constant 0 : i32
    return %c0_i32, %c0_i32_0 : i32, i32
  }
  func.func @transform_6(%arg0: i32) -> (i32, i32) {
    %c0_i32 = arith.constant 0 : i32
    %c0_i32_0 = arith.constant 0 : i32
    %c0_i32_1 = arith.constant 0 : i32
    return %c0_i32, %c0_i32_0 : i32, i32
  }
  func.func @transform_7(%arg0: i32) -> (i32, i32) {
    %c0_i32 = arith.constant 0 : i32
    %c0_i32_0 = arith.constant 0 : i32
    return %arg0, %c0_i32 : i32, i32
  }
}

</mosaic_0001>

<llo_original>
// kernel: tpu_custom_call.1
$region0: #{tpu_custom_call.1}
  #allocation0 [shape = 'u32[]', space=smem, size = 0x4, offset = 0x4, fixed_abs, tag = 'smem constant byte address 0x4 - core index']
  #allocation1 [shape = 'u32[72,128]{1,0:T(1,128)}', space=vmem, size = 0x9000, scoped, tag = 'internal scratch']
  %s0 = inlined_call_operand.vmem [shape: bf16[256,32], index: 0, kind: input, shape index: {}]
  %s1 = inlined_call_operand.vmem [shape: bf16[32,128], index: 1, kind: input, shape index: {}]
  %s2 = inlined_call_operand.vmem [shape: f32[1,128], index: 2, kind: input, shape index: {}]
  %s3 = inlined_call_operand.vmem [shape: bf16[128,128], index: 3, kind: input, shape index: {}]
  %s4 = inlined_call_operand.vmem [shape: f32[1,128], index: 4, kind: input, shape index: {}]
  %s5 = inlined_call_operand.vmem [shape: bf16[128,128], index: 5, kind: input, shape index: {}]
  %s6 = inlined_call_operand.vmem [shape: f32[1,128], index: 6, kind: input, shape index: {}]
  %s7 = inlined_call_operand.hbm [shape: f32[256,128], index: 7, kind: output, shape index: {}]
  %s8 = sld [smem:[#allocation0]]
  $region61: #{tpu_custom_call.1} parent=0
    _
  %s10 = ssub.s32 1, %s8
  %s11 = scalar_select 0, %s10, %s8
  $region1: #{tpu_custom_call.1} parent=0
    #allocation2 [shape = 'u8[131072]{0}', space=vmem, size = 0x20000, scoped, tag = 'output window, operand 0']
    #allocation3 [shape = 's32[2]{0}', space=sflag, size = 0x8, scoped, tag = 'scoped memory for tpu_custom_call.1']
    %12 = vsyncpa [#allocation3], 0
    %s13 = scalar_lea.sflag [#allocation3], 1
    %14 = vsyncpa %s13, 0
    loop: start=0, step=1, limit=4
    $region2: #{tpu_custom_call.1} parent=1 // loop_pre_header
      _
    $region3: #{tpu_custom_call.1} parent=1 // loop_header
      %s16 = sphi 0, %s20
      %p17 = scmp.ge.s32.totalorder %s16, 4
      %s26 = sphi 0, %s28
      %s29 = sphi 0, %s26
      %s30 = sphi 0, %s29
      %s46 = sphi 0, %s30
      %s50 = sphi 0, %s50
      %s52 = sphi 0, %s50
      %s53 = sphi 0, %s52
      %s67 = sphi 0, %s53
      %s71 = sphi 0, %s71
      %s73 = sphi 0, %s71
      %s74 = sphi 0, %s73
      %s88 = sphi 0, %s74
      %s92 = sphi 0, %s92
      %s94 = sphi 0, %s92
      %s95 = sphi 0, %s94
      %s109 = sphi 0, %s95
      %s113 = sphi 0, %s113
      %s115 = sphi 0, %s113
      %s116 = sphi 0, %s115
      %s130 = sphi 0, %s116
      %s134 = sphi 0, %s134
      %s136 = sphi 0, %s134
      %s137 = sphi 0, %s136
      %s151 = sphi 0, %s137
      %s155 = sphi 0, %s155
      %s157 = sphi 0, %s155
      %s158 = sphi 0, %s157
      %s172 = sphi 0, %s158
      %s178 = sphi 0, %s180
      %s181 = sphi 0, %s178
      %s182 = sphi 0, %s181
      %s198 = sphi 0, %s182
    $region4: #{tpu_custom_call.1} parent=1 // loop_header_branch
      %19 = sbr.rel (%p17) target = $region8
    $region5: #{tpu_custom_call.1} parent=1 // loop_body
      %s21 = ssub.s32 %s16, 1
      %s22 = ssub.s32 %s16, 2
      %s23 = sadd.s32 %s16, 1
      %s24 = ssub.s32 %s16, %s23
      %p25 = scmp.eq.s32.totalorder %s24, 0
      %s27 = sadd.s32 %s26, 1
      %s28 = scalar_select %p25, %s26, %s27
      %p31 = pneg %p25
      %p32 = scmp.eq.s32.totalorder %s16, 1
      %p33 = por %p31, %p32
      %p34 = scmp.ne.s32.totalorder %s26, %s29
      %p35 = scmp.eq.s32.totalorder %s16, 0
      %p36 = por %p34, %p35
      %p37 = scmp.ne.s32.totalorder %s26, %s29
      %p38 = scmp.eq.s32.totalorder %s21, 1
      %p39 = por %p37, %p38
      %p40 = scmp.ne.s32.totalorder %s29, %s30
      %p41 = scmp.eq.s32.totalorder %s21, 0
      %p42 = por %p40, %p41
      %p43 = scmp.ne.s32.totalorder %s29, %s30
      %p44 = scmp.eq.s32.totalorder %s22, 1
      %p45 = por %p43, %p44
      %p47 = scmp.ne.s32.totalorder %s30, %s46
      %p48 = scmp.eq.s32.totalorder %s22, 0
      %p49 = por %p47, %p48
      %s51 = sadd.s32 %s50, 1
      %p54 = scmp.eq.s32.totalorder %s16, 1
      %p55 = scmp.ne.s32.totalorder %s50, %s52
      %p56 = scmp.eq.s32.totalorder %s16, 0
      %p57 = por %p55, %p56
      %p58 = scmp.ne.s32.totalorder %s50, %s52
      %p59 = scmp.eq.s32.totalorder %s21, 1
      %p60 = por %p58, %p59
      %p61 = scmp.ne.s32.totalorder %s52, %s53
      %p62 = scmp.eq.s32.totalorder %s21, 0
      %p63 = por %p61, %p62
      %p64 = scmp.ne.s32.totalorder %s52, %s53
      %p65 = scmp.eq.s32.totalorder %s22, 1
      %p66 = por %p64, %p65
      %p68 = scmp.ne.s32.totalorder %s53, %s67
      %p69 = scmp.eq.s32.totalorder %s22, 0
      %p70 = por %p68, %p69
      %s72 = sadd.s32 %s71, 1
      %p75 = scmp.eq.s32.totalorder %s16, 1
      %p76 = scmp.ne.s32.totalorder %s71, %s73
      %p77 = scmp.eq.s32.totalorder %s16, 0
      %p78 = por %p76, %p77
      %p79 = scmp.ne.s32.totalorder %s71, %s73
      %p80 = scmp.eq.s32.totalorder %s21, 1
      %p81 = por %p79, %p80
      %p82 = scmp.ne.s32.totalorder %s73, %s74
      %p83 = scmp.eq.s32.totalorder %s21, 0
      %p84 = por %p82, %p83
      %p85 = scmp.ne.s32.totalorder %s73, %s74
      %p86 = scmp.eq.s32.totalorder %s22, 1
      %p87 = por %p85, %p86
      %p89 = scmp.ne.s32.totalorder %s74, %s88
      %p90 = scmp.eq.s32.totalorder %s22, 0
      %p91 = por %p89, %p90
      %s93 = sadd.s32 %s92, 1
      %p96 = scmp.eq.s32.totalorder %s16, 1
      %p97 = scmp.ne.s32.totalorder %s92, %s94
      %p98 = scmp.eq.s32.totalorder %s16, 0
      %p99 = por %p97, %p98
      %p100 = scmp.ne.s32.totalorder %s92, %s94
      %p101 = scmp.eq.s32.totalorder %s21, 1
      %p102 = por %p100, %p101
      %p103 = scmp.ne.s32.totalorder %s94, %s95
      %p104 = scmp.eq.s32.totalorder %s21, 0
      %p105 = por %p103, %p104
      %p106 = scmp.ne.s32.totalorder %s94, %s95
      %p107 = scmp.eq.s32.totalorder %s22, 1
      %p108 = por %p106, %p107
      %p110 = scmp.ne.s32.totalorder %s95, %s109
      %p111 = scmp.eq.s32.totalorder %s22, 0
      %p112 = por %p110, %p111
      %s114 = sadd.s32 %s113, 1
      %p117 = scmp.eq.s32.totalorder %s16, 1
      %p118 = scmp.ne.s32.totalorder %s113, %s115
      %p119 = scmp.eq.s32.totalorder %s16, 0
      %p120 = por %p118, %p119
      %p121 = scmp.ne.s32.totalorder %s113, %s115
      %p122 = scmp.eq.s32.totalorder %s21, 1
      %p123 = por %p121, %p122
      %p124 = scmp.ne.s32.totalorder %s115, %s116
      %p125 = scmp.eq.s32.totalorder %s21, 0
      %p126 = por %p124, %p125
      %p127 = scmp.ne.s32.totalorder %s115, %s116
      %p128 = scmp.eq.s32.totalorder %s22, 1
      %p129 = por %p127, %p128
      %p131 = scmp.ne.s32.totalorder %s116, %s130
      %p132 = scmp.eq.s32.totalorder %s22, 0
      %p133 = por %p131, %p132
      %s135 = sadd.s32 %s134, 1
      %p138 = scmp.eq.s32.totalorder %s16, 1
      %p139 = scmp.ne.s32.totalorder %s134, %s136
      %p140 = scmp.eq.s32.totalorder %s16, 0
      %p141 = por %p139, %p140
      %p142 = scmp.ne.s32.totalorder %s134, %s136
      %p143 = scmp.eq.s32.totalorder %s21, 1
      %p144 = por %p142, %p143
      %p145 = scmp.ne.s32.totalorder %s136, %s137
      %p146 = scmp.eq.s32.totalorder %s21, 0
      %p147 = por %p145, %p146
      %p148 = scmp.ne.s32.totalorder %s136, %s137
      %p149 = scmp.eq.s32.totalorder %s22, 1
      %p150 = por %p148, %p149
      %p152 = scmp.ne.s32.totalorder %s137, %s151
      %p153 = scmp.eq.s32.totalorder %s22, 0
      %p154 = por %p152, %p153
      %s156 = sadd.s32 %s155, 1
      %p159 = scmp.eq.s32.totalorder %s16, 1
      %p160 = scmp.ne.s32.totalorder %s155, %s157
      %p161 = scmp.eq.s32.totalorder %s16, 0
      %p162 = por %p160, %p161
      %p163 = scmp.ne.s32.totalorder %s155, %s157
      %p164 = scmp.eq.s32.totalorder %s21, 1
      %p165 = por %p163, %p164
      %p166 = scmp.ne.s32.totalorder %s157, %s158
      %p167 = scmp.eq.s32.totalorder %s21, 0
      %p168 = por %p166, %p167
      %p169 = scmp.ne.s32.totalorder %s157, %s158
      %p170 = scmp.eq.s32.totalorder %s22, 1
      %p171 = por %p169, %p170
      %p173 = scmp.ne.s32.totalorder %s158, %s172
      %p174 = scmp.eq.s32.totalorder %s22, 0
      %p175 = por %p173, %p174
      %s176 = ssub.s32 %s16, %s23
      %p177 = scmp.eq.s32.totalorder %s176, 0
      %s179 = sadd.s32 %s178, 1
      %s180 = scalar_select %p177, %s178, %s179
      %p183 = pneg %p177
      %p184 = scmp.eq.s32.totalorder %s16, 1
      %p185 = por %p183, %p184
      %p186 = scmp.ne.s32.totalorder %s178, %s181
      %p187 = scmp.eq.s32.totalorder %s16, 0
      %p188 = por %p186, %p187
      %p189 = scmp.ne.s32.totalorder %s178, %s181
      %p190 = scmp.eq.s32.totalorder %s21, 1
      %p191 = por %p189, %p190
      %p192 = scmp.ne.s32.totalorder %s181, %s182
      %p193 = scmp.eq.s32.totalorder %s21, 0
      %p194 = por %p192, %p193
      %p195 = scmp.ne.s32.totalorder %s181, %s182
      %p196 = scmp.eq.s32.totalorder %s22, 1
      %p197 = por %p195, %p196
      %p199 = scmp.ne.s32.totalorder %s182, %s198
      %p200 = scmp.eq.s32.totalorder %s22, 0
      %p201 = por %p199, %p200
      %p202 = scmp.le.s32.totalorder 1, %s16
      %p203 = scmp.lt.s32.totalorder %s16, 3
      %p204 = pnand %p202, %p203
      %p205 = pneg %p204
      // Predicated region
      $region9: #{tpu_custom_call.1} parent=5 // pred_check
        _
      $region10: #{tpu_custom_call.1} parent=5 // pred_check_branch
        %207 = sbr.rel (%p204) target = $region12
      $region11: #{tpu_custom_call.1} parent=5 // pred_region
        %s208 = ssub.s32 %s16, 1
        // Predicated region
        $region13: #{tpu_custom_call.1} parent=11 // pred_check
          %p209 = pneg %p63
        $region14: #{tpu_custom_call.1} parent=11 // pred_check_branch
          %211 = sbr.rel (%p209) target = $region16
        $region15: #{tpu_custom_call.1} parent=11 // pred_region
          _
        $region16: #{tpu_custom_call.1} parent=11 // pred_fallthru
          _
        // Predicated region
        $region17: #{tpu_custom_call.1} parent=11 // pred_check
          %p212 = pneg %p84
        $region18: #{tpu_custom_call.1} parent=11 // pred_check_branch
          %214 = sbr.rel (%p212) target = $region20
        $region19: #{tpu_custom_call.1} parent=11 // pred_region
          _
        $region20: #{tpu_custom_call.1} parent=11 // pred_fallthru
          _
        // Predicated region
        $region21: #{tpu_custom_call.1} parent=11 // pred_check
          %p215 = pneg %p105
        $region22: #{tpu_custom_call.1} parent=11 // pred_check_branch
          %217 = sbr.rel (%p215) target = $region24
        $region23: #{tpu_custom_call.1} parent=11 // pred_region
          _
        $region24: #{tpu_custom_call.1} parent=11 // pred_fallthru
          _
        // Predicated region
        $region25: #{tpu_custom_call.1} parent=11 // pred_check
          %p218 = pneg %p126
        $region26: #{tpu_custom_call.1} parent=11 // pred_check_branch
          %220 = sbr.rel (%p218) target = $region28
        $region27: #{tpu_custom_call.1} parent=11 // pred_region
          _
        $region28: #{tpu_custom_call.1} parent=11 // pred_fallthru
          _
        // Predicated region
        $region29: #{tpu_custom_call.1} parent=11 // pred_check
          %p221 = pneg %p147
        $region30: #{tpu_custom_call.1} parent=11 // pred_check_branch
          %223 = sbr.rel (%p221) target = $region32
        $region31: #{tpu_custom_call.1} parent=11 // pred_region
          _
        $region32: #{tpu_custom_call.1} parent=11 // pred_fallthru
          _
        // Predicated region
        $region33: #{tpu_custom_call.1} parent=11 // pred_check
          %p224 = pneg %p168
        $region34: #{tpu_custom_call.1} parent=11 // pred_check_branch
          %226 = sbr.rel (%p224) target = $region36
        $region35: #{tpu_custom_call.1} parent=11 // pred_region
          _
        $region36: #{tpu_custom_call.1} parent=11 // pred_fallthru
          _
      $region12: #{tpu_custom_call.1} parent=5 // pred_fallthru
        _
      %p227 = scmp.lt.s32.totalorder %s16, 2
      // Predicated region
      $region37: #{tpu_custom_call.1} parent=5 // pred_check
        %p228 = pneg %p227
      $region38: #{tpu_custom_call.1} parent=5 // pred_check_branch
        %230 = sbr.rel (%p228) target = $region40
      $region39: #{tpu_custom_call.1} parent=5 // pred_region
        // Predicated region
        $region41: #{tpu_custom_call.1} parent=39 // pred_check
          %p231 = pneg %p36
        $region42: #{tpu_custom_call.1} parent=39 // pred_check_branch
          %233 = sbr.rel (%p231) target = $region44
        $region43: #{tpu_custom_call.1} parent=39 // pred_region
          %s234 = smul.u32 16, %s16
          %p235 = scmp.lt.s32.totalorder %s234, 31
          %s236 = scalar_select %p235, %s234, 31
          %s237 = smul.addr %s236, 4
          %s238 = scalar_lea.vmem %s0, %s237
          %s239 = smul.u32 16, %s16
        $region44: #{tpu_custom_call.1} parent=39 // pred_fallthru
          _
      $region40: #{tpu_custom_call.1} parent=5 // pred_fallthru
        _
      %p240 = scmp.le.s32.totalorder 1, %s16
      %p241 = scmp.lt.s32.totalorder %s16, 3
      %p242 = pnand %p240, %p241
      %p243 = pneg %p242
      // Predicated region
      $region45: #{tpu_custom_call.1} parent=5 // pred_check
        _
      $region46: #{tpu_custom_call.1} parent=5 // pred_check_branch
        %245 = sbr.rel (%p242) target = $region48
      $region47: #{tpu_custom_call.1} parent=5 // pred_region
        %s246 = ssub.s32 %s16, 1
        %s247 = smul.u32 16, %s21
        %p248 = scmp.lt.s32.totalorder %s247, 31
        %s249 = scalar_select %p248, %s247, 31
        %s250 = smul.addr %s249, 4
        %s251 = scalar_lea.vmem %s0, %s250
        %p252 = pneg %p42
        %p253 = pneg %p39
        %p254 = pneg %p63
        %p255 = pneg %p60
        %p256 = pneg %p84
        %p257 = pneg %p81
        %p258 = pneg %p105
        %p259 = pneg %p102
        %p260 = pneg %p126
        %p261 = pneg %p123
        %p262 = pneg %p147
        %p263 = pneg %p144
        %p264 = pneg %p168
        %p265 = pneg %p165
        %p266 = pneg %p194
        %p267 = pneg %p191
        %s268 = sand.u32 %s181, 1
        %s269 = scalar_lea.sflag [#allocation3], %s268
        %s270 = sand.u32 %s181, 1
        %s271 = smul.addr %s270, 128
        %s272 = scalar_lea.vmem [#allocation2], %s271
        %s273 = smul.u32 16, %s21
        %p274 = scmp.lt.s32.totalorder %s273, 31
        %s275 = scalar_select %p274, %s273, 31
        %s276 = smul.addr %s275, 4
        %s277 = scalar_lea.vmem %s0, %s276
        %s278 = smul.u32 16, %s21
        %s279 = smul.u32 16, %s21
        %v281 = vld [vmem:[%s277] sm:$0xf]
        %v282 = vld [vmem:[%s277 + $0x4] sm:$0xf]
        %v283 = vld [vmem:[%s277 + $0x8] sm:$0xf]
        %v284 = vld [vmem:[%s277 + $0xc] sm:$0xf]
        %v285 = vld [vmem:[%s277 + $0x10] sm:$0xf]
        %v286 = vld [vmem:[%s277 + $0x14] sm:$0xf]
        %v287 = vld [vmem:[%s277 + $0x18] sm:$0xf]
        %v288 = vld [vmem:[%s277 + $0x1c] sm:$0xf]
        %v289 = vld [vmem:[%s277 + $0x20] sm:$0xf]
        %v290 = vld [vmem:[%s277 + $0x24] sm:$0xf]
        %v291 = vld [vmem:[%s277 + $0x28] sm:$0xf]
        %v292 = vld [vmem:[%s277 + $0x2c] sm:$0xf]
        %v293 = vld [vmem:[%s277 + $0x30] sm:$0xf]
        %v294 = vld [vmem:[%s277 + $0x34] sm:$0xf]
        %v295 = vld [vmem:[%s277 + $0x38] sm:$0xf]
        %v296 = vld [vmem:[%s277 + $0x3c] sm:$0xf]
        %v297 = vld [vmem:[%s1] sm:$0xf]
        %v298 = vld [vmem:[%s1 + $0x4] sm:$0xf]
        %v299 = vld [vmem:[%s1 + $0x8] sm:$0xf]
        %v300 = vld [vmem:[%s1 + $0xc] sm:$0xf]
        %v301 = vld [vmem:[%s2] sm:$0x1]
        %v303 = vperm.slane %v301, 0
        %v321 = vunpack.c.l.b16 %v281
        %v322 = vunpack.c.l.b16 %v282
        %v323 = vunpack.c.l.b16 %v283
        %v324 = vunpack.c.l.b16 %v284
        %v325 = vunpack.c.l.b16 %v285
        %v326 = vunpack.c.l.b16 %v286
        %v327 = vunpack.c.l.b16 %v287
        %v328 = vunpack.c.l.b16 %v288
        %v329 = vunpack.c.l.b16 %v289
        %v330 = vunpack.c.l.b16 %v290
        %v331 = vunpack.c.l.b16 %v291
        %v332 = vunpack.c.l.b16 %v292
        %v333 = vunpack.c.l.b16 %v293
        %v334 = vunpack.c.l.b16 %v294
        %v335 = vunpack.c.l.b16 %v295
        %v336 = vunpack.c.l.b16 %v296
        %v337 = vpack.c.b16 %v322, %v321
        %v338 = vpack.c.b16 %v324, %v323
        %v339 = vpack.c.b16 %v326, %v325
        %v340 = vpack.c.b16 %v328, %v327
        %v341 = vpack.c.b16 %v330, %v329
        %v342 = vpack.c.b16 %v332, %v331
        %v343 = vpack.c.b16 %v334, %v333
        %v344 = vpack.c.b16 %v336, %v335
        %v349 = vunpack.c.l.b16 %v297
        %v350 = vunpack.c.l.b16 %v298
        %v351 = vunpack.c.l.b16 %v299
        %v352 = vunpack.c.l.b16 %v300
        %v353 = vpack.c.b16 %v350, %v349
        %v354 = vpack.c.b16 %v352, %v351
        %vm357 = vcmask 261120
        %v359 = vsel %vm357, %v337, 0
        %v362 = vsel %vm357, %v338, 0
        %v365 = vsel %vm357, %v339, 0
        %v368 = vsel %vm357, %v340, 0
        %v371 = vsel %vm357, %v341, 0
        %v374 = vsel %vm357, %v342, 0
        %v377 = vsel %vm357, %v343, 0
        %v380 = vsel %vm357, %v344, 0
        %382 = vmatpush.bf16.msra.mxu0 0
        %383 = vmatpush.bf16.msra.mxu0 0
        %384 = vmatpush.bf16.msra.mxu0 0
        %385 = vmatpush.bf16.msra.mxu0 0
        %386 = vmatpush.bf16.msra.mxu0 0
        %387 = vmatpush.bf16.msra.mxu0 0
        %388 = vmatpush.bf16.msra.mxu0 %v354
        %389 = vmatpush.bf16.msra.mxu0 %v353
        %390 = vmatmul.bf16.gmra.mxu0 %v359
        %v391 = vpop.f32.mrf.mxu0
        %v392 = vadd.f32 %v303, %v391
        %v393 = vpop.f32.mrf.mxu0
        %v394 = vadd.f32 %v303, %v393
        %395 = vmatmul.bf16.gmra.mxu0 %v362
        %v396 = vpop.f32.mrf.mxu0
        %v397 = vadd.f32 %v303, %v396
        %v398 = vpop.f32.mrf.mxu0
        %v399 = vadd.f32 %v303, %v398
        %400 = vmatmul.bf16.gmra.mxu0 %v365
        %v401 = vpop.f32.mrf.mxu0
        %v402 = vadd.f32 %v303, %v401
        %v403 = vpop.f32.mrf.mxu0
        %v404 = vadd.f32 %v303, %v403
        %405 = vmatmul.bf16.gmra.mxu0 %v368
        %v406 = vpop.f32.mrf.mxu0
        %v407 = vadd.f32 %v303, %v406
        %v408 = vpop.f32.mrf.mxu0
        %v409 = vadd.f32 %v303, %v408
        %410 = vmatmul.bf16.gmra.mxu0 %v371
        %v411 = vpop.f32.mrf.mxu0
        %v412 = vadd.f32 %v303, %v411
        %v413 = vpop.f32.mrf.mxu0
        %v414 = vadd.f32 %v303, %v413
        %415 = vmatmul.bf16.gmra.mxu0 %v374
        %v416 = vpop.f32.mrf.mxu0
        %v417 = vadd.f32 %v303, %v416
        %v418 = vpop.f32.mrf.mxu0
        %v419 = vadd.f32 %v303, %v418
        %420 = vmatmul.bf16.gmra.mxu0 %v377
        %v421 = vpop.f32.mrf.mxu0
        %v422 = vadd.f32 %v303, %v421
        %v423 = vpop.f32.mrf.mxu0
        %v424 = vadd.f32 %v303, %v423
        %425 = vmatmul.bf16.gmra.mxu0 %v380
        %v426 = vpop.f32.mrf.mxu0
        %v427 = vadd.f32 %v303, %v426
        %v428 = vpop.f32.mrf.mxu0
        %v429 = vadd.f32 %v303, %v428
        %430 = vdwg.mxu0
        %v431 = vmax.f32 %v392, 0.0
        %v432 = vmax.f32 %v394, 0.0
        %v433 = vmax.f32 %v397, 0.0
        %v434 = vmax.f32 %v399, 0.0
        %v435 = vmax.f32 %v402, 0.0
        %v436 = vmax.f32 %v404, 0.0
        %v437 = vmax.f32 %v407, 0.0
        %v438 = vmax.f32 %v409, 0.0
        %v439 = vmax.f32 %v412, 0.0
        %v440 = vmax.f32 %v414, 0.0
        %v441 = vmax.f32 %v417, 0.0
        %v442 = vmax.f32 %v419, 0.0
        %v443 = vmax.f32 %v422, 0.0
        %v444 = vmax.f32 %v424, 0.0
        %v445 = vmax.f32 %v427, 0.0
        %v446 = vmax.f32 %v429, 0.0
        %v447 = vpack.c.bf16 %v432, %v431
        %v448 = vpack.c.bf16 %v434, %v433
        %v449 = vpack.c.bf16 %v436, %v435
        %v450 = vpack.c.bf16 %v438, %v437
        %v451 = vpack.c.bf16 %v440, %v439
        %v452 = vpack.c.bf16 %v442, %v441
        %v453 = vpack.c.bf16 %v444, %v443
        %v454 = vpack.c.bf16 %v446, %v445
        %v455 = vld [vmem:[%s3] sm:$0xf]
        %v456 = vld [vmem:[%s3 + $0x4] sm:$0xf]
        %v457 = vld [vmem:[%s3 + $0x8] sm:$0xf]
        %v458 = vld [vmem:[%s3 + $0xc] sm:$0xf]
        %v459 = vld [vmem:[%s3 + $0x10] sm:$0xf]
        %v460 = vld [vmem:[%s3 + $0x14] sm:$0xf]
        %v461 = vld [vmem:[%s3 + $0x18] sm:$0xf]
        %v462 = vld [vmem:[%s3 + $0x1c] sm:$0xf]
        %v463 = vld [vmem:[%s3 + $0x20] sm:$0xf]
        %v464 = vld [vmem:[%s3 + $0x24] sm:$0xf]
        %v465 = vld [vmem:[%s3 + $0x28] sm:$0xf]
        %v466 = vld [vmem:[%s3 + $0x2c] sm:$0xf]
        %v467 = vld [vmem:[%s3 + $0x30] sm:$0xf]
        %v468 = vld [vmem:[%s3 + $0x34] sm:$0xf]
        %v469 = vld [vmem:[%s3 + $0x38] sm:$0xf]
        %v470 = vld [vmem:[%s3 + $0x3c] sm:$0xf]
        %v471 = vld [vmem:[%s4] sm:$0x1]
        %v473 = vperm.slane %v471, 0
        %v491 = vunpack.c.l.b16 %v455
        %v492 = vunpack.c.l.b16 %v456
        %v493 = vunpack.c.l.b16 %v457
        %v494 = vunpack.c.l.b16 %v458
        %v495 = vunpack.c.l.b16 %v459
        %v496 = vunpack.c.l.b16 %v460
        %v497 = vunpack.c.l.b16 %v461
        %v498 = vunpack.c.l.b16 %v462
        %v499 = vunpack.c.l.b16 %v463
        %v500 = vunpack.c.l.b16 %v464
        %v501 = vunpack.c.l.b16 %v465
        %v502 = vunpack.c.l.b16 %v466
        %v503 = vunpack.c.l.b16 %v467
        %v504 = vunpack.c.l.b16 %v468
        %v505 = vunpack.c.l.b16 %v469
        %v506 = vunpack.c.l.b16 %v470
        %v507 = vpack.c.b16 %v492, %v491
        %v508 = vpack.c.b16 %v494, %v493
        %v509 = vpack.c.b16 %v496, %v495
        %v510 = vpack.c.b16 %v498, %v497
        %v511 = vpack.c.b16 %v500, %v499
        %v512 = vpack.c.b16 %v502, %v501
        %v513 = vpack.c.b16 %v504, %v503
        %v514 = vpack.c.b16 %v506, %v505
        %523 = vmatpush.bf16.msra.mxu0 %v514
        %524 = vmatpush.bf16.msra.mxu0 %v513
        %525 = vmatpush.bf16.msra.mxu0 %v512
        %526 = vmatpush.bf16.msra.mxu0 %v511
        %527 = vmatpush.bf16.msra.mxu0 %v510
        %528 = vmatpush.bf16.msra.mxu0 %v509
        %529 = vmatpush.bf16.msra.mxu0 %v508
        %530 = vmatpush.bf16.msra.mxu0 %v507
        %531 = vmatmul.bf16.gmra.mxu0 %v447
        %v532 = vpop.f32.mrf.mxu0
        %v533 = vadd.f32 %v473, %v532
        %v534 = vpop.f32.mrf.mxu0
        %v535 = vadd.f32 %v473, %v534
        %536 = vmatmul.bf16.gmra.mxu0 %v448
        %v537 = vpop.f32.mrf.mxu0
        %v538 = vadd.f32 %v473, %v537
        %v539 = vpop.f32.mrf.mxu0
        %v540 = vadd.f32 %v473, %v539
        %541 = vmatmul.bf16.gmra.mxu0 %v449
        %v542 = vpop.f32.mrf.mxu0
        %v543 = vadd.f32 %v473, %v542
        %v544 = vpop.f32.mrf.mxu0
        %v545 = vadd.f32 %v473, %v544
        %546 = vmatmul.bf16.gmra.mxu0 %v450
        %v547 = vpop.f32.mrf.mxu0
        %v548 = vadd.f32 %v473, %v547
        %v549 = vpop.f32.mrf.mxu0
        %v550 = vadd.f32 %v473, %v549
        %551 = vmatmul.bf16.gmra.mxu0 %v451
        %v552 = vpop.f32.mrf.mxu0
        %v553 = vadd.f32 %v473, %v552
        %v554 = vpop.f32.mrf.mxu0
        %v555 = vadd.f32 %v473, %v554
        %556 = vmatmul.bf16.gmra.mxu0 %v452
        %v557 = vpop.f32.mrf.mxu0
        %v558 = vadd.f32 %v473, %v557
        %v559 = vpop.f32.mrf.mxu0
        %v560 = vadd.f32 %v473, %v559
        %561 = vmatmul.bf16.gmra.mxu0 %v453
        %v562 = vpop.f32.mrf.mxu0
        %v563 = vadd.f32 %v473, %v562
        %v564 = vpop.f32.mrf.mxu0
        %v565 = vadd.f32 %v473, %v564
        %566 = vmatmul.bf16.gmra.mxu0 %v454
        %v567 = vpop.f32.mrf.mxu0
        %v568 = vadd.f32 %v473, %v567
        %v569 = vpop.f32.mrf.mxu0
        %v570 = vadd.f32 %v473, %v569
        %571 = vdwg.mxu0
        %v572 = vmax.f32 %v533, 0.0
        %v573 = vmax.f32 %v535, 0.0
        %v574 = vmax.f32 %v538, 0.0
        %v575 = vmax.f32 %v540, 0.0
        %v576 = vmax.f32 %v543, 0.0
        %v577 = vmax.f32 %v545, 0.0
        %v578 = vmax.f32 %v548, 0.0
        %v579 = vmax.f32 %v550, 0.0
        %v580 = vmax.f32 %v553, 0.0
        %v581 = vmax.f32 %v555, 0.0
        %v582 = vmax.f32 %v558, 0.0
        %v583 = vmax.f32 %v560, 0.0
        %v584 = vmax.f32 %v563, 0.0
        %v585 = vmax.f32 %v565, 0.0
        %v586 = vmax.f32 %v568, 0.0
        %v587 = vmax.f32 %v570, 0.0
        %v588 = vpack.c.bf16 %v573, %v572
        %v589 = vpack.c.bf16 %v575, %v574
        %v590 = vpack.c.bf16 %v577, %v576
        %v591 = vpack.c.bf16 %v579, %v578
        %v592 = vpack.c.bf16 %v581, %v580
        %v593 = vpack.c.bf16 %v583, %v582
        %v594 = vpack.c.bf16 %v585, %v584
        %v595 = vpack.c.bf16 %v587, %v586
        %v596 = vld [vmem:[%s5] sm:$0xf]
        %v597 = vld [vmem:[%s5 + $0x4] sm:$0xf]
        %v598 = vld [vmem:[%s5 + $0x8] sm:$0xf]
        %v599 = vld [vmem:[%s5 + $0xc] sm:$0xf]
        %v600 = vld [vmem:[%s5 + $0x10] sm:$0xf]
        %v601 = vld [vmem:[%s5 + $0x14] sm:$0xf]
        %v602 = vld [vmem:[%s5 + $0x18] sm:$0xf]
        %v603 = vld [vmem:[%s5 + $0x1c] sm:$0xf]
        %v604 = vld [vmem:[%s5 + $0x20] sm:$0xf]
        %v605 = vld [vmem:[%s5 + $0x24] sm:$0xf]
        %v606 = vld [vmem:[%s5 + $0x28] sm:$0xf]
        %v607 = vld [vmem:[%s5 + $0x2c] sm:$0xf]
        %v608 = vld [vmem:[%s5 + $0x30] sm:$0xf]
        %v609 = vld [vmem:[%s5 + $0x34] sm:$0xf]
        %v610 = vld [vmem:[%s5 + $0x38] sm:$0xf]
        %v611 = vld [vmem:[%s5 + $0x3c] sm:$0xf]
        %v612 = vld [vmem:[%s6] sm:$0x1]
        %v614 = vperm.slane %v612, 0
        %v632 = vunpack.c.l.b16 %v596
        %v633 = vunpack.c.l.b16 %v597
        %v634 = vunpack.c.l.b16 %v598
        %v635 = vunpack.c.l.b16 %v599
        %v636 = vunpack.c.l.b16 %v600
        %v637 = vunpack.c.l.b16 %v601
        %v638 = vunpack.c.l.b16 %v602
        %v639 = vunpack.c.l.b16 %v603
        %v640 = vunpack.c.l.b16 %v604
        %v641 = vunpack.c.l.b16 %v605
        %v642 = vunpack.c.l.b16 %v606
        %v643 = vunpack.c.l.b16 %v607
        %v644 = vunpack.c.l.b16 %v608
        %v645 = vunpack.c.l.b16 %v609
        %v646 = vunpack.c.l.b16 %v610
        %v647 = vunpack.c.l.b16 %v611
        %v648 = vpack.c.b16 %v633, %v632
        %v649 = vpack.c.b16 %v635, %v634
        %v650 = vpack.c.b16 %v637, %v636
        %v651 = vpack.c.b16 %v639, %v638
        %v652 = vpack.c.b16 %v641, %v640
        %v653 = vpack.c.b16 %v643, %v642
        %v654 = vpack.c.b16 %v645, %v644
        %v655 = vpack.c.b16 %v647, %v646
        %664 = vmatpush.bf16.msra.mxu0 %v655
        %665 = vmatpush.bf16.msra.mxu0 %v654
        %666 = vmatpush.bf16.msra.mxu0 %v653
        %667 = vmatpush.bf16.msra.mxu0 %v652
        %668 = vmatpush.bf16.msra.mxu0 %v651
        %669 = vmatpush.bf16.msra.mxu0 %v650
        %670 = vmatpush.bf16.msra.mxu0 %v649
        %671 = vmatpush.bf16.msra.mxu0 %v648
        %672 = vmatmul.bf16.gmra.mxu0 %v588
        %v673 = vpop.f32.mrf.mxu0
        %v674 = vadd.f32 %v614, %v673
        %v675 = vpop.f32.mrf.mxu0
        %v676 = vadd.f32 %v614, %v675
        %677 = vmatmul.bf16.gmra.mxu0 %v589
        %v678 = vpop.f32.mrf.mxu0
        %v679 = vadd.f32 %v614, %v678
        %v680 = vpop.f32.mrf.mxu0
        %v681 = vadd.f32 %v614, %v680
        %682 = vmatmul.bf16.gmra.mxu0 %v590
        %v683 = vpop.f32.mrf.mxu0
        %v684 = vadd.f32 %v614, %v683
        %v685 = vpop.f32.mrf.mxu0
        %v686 = vadd.f32 %v614, %v685
        %687 = vmatmul.bf16.gmra.mxu0 %v591
        %v688 = vpop.f32.mrf.mxu0
        %v689 = vadd.f32 %v614, %v688
        %v690 = vpop.f32.mrf.mxu0
        %v691 = vadd.f32 %v614, %v690
        %692 = vmatmul.bf16.gmra.mxu0 %v592
        %v693 = vpop.f32.mrf.mxu0
        %v694 = vadd.f32 %v614, %v693
        %v695 = vpop.f32.mrf.mxu0
        %v696 = vadd.f32 %v614, %v695
        %697 = vmatmul.bf16.gmra.mxu0 %v593
        %v698 = vpop.f32.mrf.mxu0
        %v699 = vadd.f32 %v614, %v698
        %v700 = vpop.f32.mrf.mxu0
        %v701 = vadd.f32 %v614, %v700
        %702 = vmatmul.bf16.gmra.mxu0 %v594
        %v703 = vpop.f32.mrf.mxu0
        %v704 = vadd.f32 %v614, %v703
        %v705 = vpop.f32.mrf.mxu0
        %v706 = vadd.f32 %v614, %v705
        %707 = vmatmul.bf16.gmra.mxu0 %v595
        %v708 = vpop.f32.mrf.mxu0
        %v709 = vadd.f32 %v614, %v708
        %v710 = vpop.f32.mrf.mxu0
        %v711 = vadd.f32 %v614, %v710
        %712 = vdwg.mxu0
        %713 = vst [vmem:[%s272] sm:$0xff] %v674
        %714 = vst [vmem:[%s272 + $0x8] sm:$0xff] %v676
        %715 = vst [vmem:[%s272 + $0x10] sm:$0xff] %v679
        %716 = vst [vmem:[%s272 + $0x18] sm:$0xff] %v681
        %717 = vst [vmem:[%s272 + $0x20] sm:$0xff] %v684
        %718 = vst [vmem:[%s272 + $0x28] sm:$0xff] %v686
        %719 = vst [vmem:[%s272 + $0x30] sm:$0xff] %v689
        %720 = vst [vmem:[%s272 + $0x38] sm:$0xff] %v691
        %721 = vst [vmem:[%s272 + $0x40] sm:$0xff] %v694
        %722 = vst [vmem:[%s272 + $0x48] sm:$0xff] %v696
        %723 = vst [vmem:[%s272 + $0x50] sm:$0xff] %v699
        %724 = vst [vmem:[%s272 + $0x58] sm:$0xff] %v701
        %725 = vst [vmem:[%s272 + $0x60] sm:$0xff] %v704
        %726 = vst [vmem:[%s272 + $0x68] sm:$0xff] %v706
        %727 = vst [vmem:[%s272 + $0x70] sm:$0xff] %v709
        %728 = vst [vmem:[%s272 + $0x78] sm:$0xff] %v711
        %s729 = sand.u32 %s181, 1
        %s730 = scalar_lea.sflag [#allocation3], %s729
        %s731 = sand.u32 %s181, 1
        %s732 = smul.addr %s731, 128
        %s733 = scalar_lea.vmem [#allocation2], %s732
        // Predicated region
        $region49: #{tpu_custom_call.1} parent=47 // pred_check
          %p734 = pneg %p191
        $region50: #{tpu_custom_call.1} parent=47 // pred_check_branch
          %736 = sbr.rel (%p734) target = $region52
        $region51: #{tpu_custom_call.1} parent=47 // pred_region
          %s737 = smul.u32 16, %s21
          %739 = vsyncadd %s730, 0
          %s740 = smul.addr %s737, 8
          %s741 = scalar_lea.hbm %s7, %s740
          %s742 = sshll.u32 %s733, 4
          %s743 = int_to_ptr.vmem [resolvable:$true] %s742
          %s744 = sshll.u32 %s741, 4
          %s745 = int_to_ptr.hbm [resolvable:$true] %s744
          %750 = dma.vmem_to_hbm [thread:$0]  %s743, 2048, %s745, %s730, 128, 128, 8
        $region52: #{tpu_custom_call.1} parent=47 // pred_fallthru
          _
      $region48: #{tpu_custom_call.1} parent=5 // pred_fallthru
        _
      %p751 = scmp.le.s32.totalorder 2, %s16
      // Predicated region
      $region53: #{tpu_custom_call.1} parent=5 // pred_check
        %p752 = pneg %p751
      $region54: #{tpu_custom_call.1} parent=5 // pred_check_branch
        %754 = sbr.rel (%p752) target = $region56
      $region55: #{tpu_custom_call.1} parent=5 // pred_region
        %s755 = ssub.s32 %s16, 2
        // Predicated region
        $region57: #{tpu_custom_call.1} parent=55 // pred_check
          %p756 = pneg %p197
        $region58: #{tpu_custom_call.1} parent=55 // pred_check_branch
          %758 = sbr.rel (%p756) target = $region60
        $region59: #{tpu_custom_call.1} parent=55 // pred_region
          %s759 = sand.u32 %s182, 1
          %s760 = scalar_lea.sflag [#allocation3], %s759
          %s761 = sand.u32 %s182, 1
          %s762 = smul.addr %s761, 128
          %s763 = scalar_lea.vmem [#allocation2], %s762
          %765 = dma.done %s760, 2048
        $region60: #{tpu_custom_call.1} parent=55 // pred_fallthru
          _
      $region56: #{tpu_custom_call.1} parent=5 // pred_fallthru
        _
    $region6: #{tpu_custom_call.1} parent=1 // loop_footer
      %s20 = sadd.s32 1, %s16
    $region7: #{tpu_custom_call.1} parent=1 // loop_footer_branch
      %15 = sbr.rel target = $region3
    $region8: #{tpu_custom_call.1} parent=1 // loop_exit
      _
    %766 = vsyncpa [#allocation3], 1
    %s767 = scalar_lea.sflag [#allocation3], 1
    %768 = vsyncpa %s767, 1

</llo_original>
